<compile_context>
chip_gen: v6e
topology: v6e:2x2x1
jax: 0.10.0
libtpu: 0.0.40
codegen_flags: <defaults>
</compile_context>

<pallas_src>
import functools
import math

import jax
import jax.numpy as jnp
from jax.experimental import pallas as pl
from jax.experimental.pallas import tpu as pltpu


# ------------------------------- kernel --------------------------------------


def encoder_subnet_kernel(
    x_ref, w1, b1, w2, b2, w3, b3, w4, b4, mu_ref, logvar_ref, *, latent_dim
):
    """Fused MLP encoder: 3x (Linear + Tanh) then one merged (hidden, 2*latent) head.

    Dropout layers are identity in this deterministic (eval-mode) forward.
    All matmuls accumulate in f32 on the MXU; tanh runs on the EUP/VPU.
    The 2*latent-lane head result is split into mu / logvar in vregs — no
    wrapper-side slicing, no second head matmul.
    """
    x = x_ref[...]
    h = jnp.tanh(jnp.dot(x, w1[...], preferred_element_type=jnp.float32) + b1[...])
    h = jnp.tanh(jnp.dot(h, w2[...], preferred_element_type=jnp.float32) + b2[...])
    h = jnp.tanh(jnp.dot(h, w3[...], preferred_element_type=jnp.float32) + b3[...])
    y = jnp.dot(h, w4[...], preferred_element_type=jnp.float32) + b4[...]
    mu_ref[...] = y[:, :latent_dim]
    logvar_ref[...] = y[:, latent_dim:]


# ----------------------------- pallas wrapper ---------------------------------


def _pick_block_rows(batch):
    """Large ragged-tolerant row tiles; guarantee >=2 grid steps for big batches.

    ~0.35 us per grid step means 512-1024 row tiles hit the HBM roofline, while
    the per-row VMEM cost here is ~100 B, so 1024-row tiles are nowhere near any
    VMEM limit. For batches big enough that splitting pays for the extra step,
    cap at ~batch/2 (rounded up to 8 sublanes) so v7x's second TensorCore gets
    work via dimension_semantics=("parallel",); harmless on 1-TC v5e/v6e.
    """
    block_rows = min(batch, 1024)
    if batch >= 512:
        half = -(-((batch + 1) // 2) // 8) * 8  # cdiv(batch, 2) rounded up to 8 rows
        block_rows = min(block_rows, half)
    return block_rows


def _vmem_estimate_bytes(block_rows, in_dim, hidden_dim, latent_dim, weight_bufs):
    """Rough resident VMEM: weights (x weight_bufs) + double-buffered x/mu/logvar."""
    f32 = 4
    w_elems = (
        in_dim * hidden_dim
        + 2 * hidden_dim * hidden_dim
        + hidden_dim * 2 * latent_dim
        + 3 * hidden_dim
        + 2 * latent_dim
    )
    io_elems = block_rows * (in_dim + 2 * latent_dim)
    return f32 * (weight_bufs * w_elems + 2 * io_elems)


def encoder_subnet_forward(
    x, params, latent_dim, *, block_rows=None, single_buffer_weights=False
):
    """Runs the fused EncoderSubnet kernel. Returns (mu, logvar)."""
    # Mirrors PyTorch's `if x.dtype == torch.int64: x = x.float()`.
    if jnp.issubdtype(x.dtype, jnp.integer):
        x = x.astype(jnp.float32)

    batch, in_dim = x.shape
    hidden_dim = params[0].shape[1]
    if block_rows is None:
        block_rows = _pick_block_rows(batch)
    grid = (pl.cdiv(batch, block_rows),)  # ragged last tile handled by Pallas

    row_map = lambda i: (i, 0)      # tile over batch rows
    const_map = lambda i: (0, 0)    # weights / biases stay resident across steps

    in_specs = [pl.BlockSpec((block_rows, in_dim), row_map)]
    if single_buffer_weights:
        # Constant-index blocks need no second pipeline buffer; halves resident
        # weight VMEM as hidden_dim scales (matters first on v7x / v5e limits).
        weight_specs = [
            pl.BlockSpec(p.shape, const_map, pipeline_mode=pl.Buffered(1))
            for p in params
        ]
    else:
        weight_specs = [pl.BlockSpec(p.shape, const_map) for p in params]
    in_specs += weight_specs

    out_shape = (
        jax.ShapeDtypeStruct((batch, latent_dim), jnp.float32),
        jax.ShapeDtypeStruct((batch, latent_dim), jnp.float32),
    )
    out_specs = (
        pl.BlockSpec((block_rows, latent_dim), row_map),
        pl.BlockSpec((block_rows, latent_dim), row_map),
    )

    # Advisory cost estimate so XLA overlaps this overhead-bound kernel with
    # neighboring HLOs instead of treating it as an opaque blocking call.
    n_w_elems = sum(int(p.size) for p in params)
    flops = 2 * batch * (in_dim * hidden_dim + 2 * hidden_dim * hidden_dim
                         + hidden_dim * 2 * latent_dim)
    cost = pl.CostEstimate(
        flops=flops,
        transcendentals=3 * batch * hidden_dim,
        bytes_accessed=4 * (batch * in_dim + n_w_elems + 2 * batch * latent_dim),
    )

    # VMEM budget guard: the all-weights-resident design caps out around
    # hidden_dim ~1k (default scoped limits) and ~1.8k (v7x 64 MiB physical).
    # Raise the scoped limit when we approach it; beyond that a K/N-tiled grid
    # with an f32 accumulator would be required.
    # TODO(synk): add a K-tiled ("arbitrary" axis + VMEM accumulator) variant for
    # hidden_dim large enough to exceed v7x's 64 MiB physical VMEM.
    weight_bufs = 1 if single_buffer_weights else 2
    vmem_bytes = _vmem_estimate_bytes(
        block_rows, in_dim, hidden_dim, latent_dim, weight_bufs
    )
    compiler_kwargs = {}
    if 2 * vmem_bytes > (12 << 20):  # nearing the smallest (v5e, 16 MiB) default
        compiler_kwargs["vmem_limit_bytes"] = min(2 * vmem_bytes, 64 << 20)

    kernel = functools.partial(encoder_subnet_kernel, latent_dim=latent_dim)

    return pl.pallas_call(
        kernel,
        grid=grid,
        in_specs=in_specs,
        out_specs=out_specs,
        out_shape=out_shape,
        cost_estimate=cost,
        compiler_params=pltpu.CompilerParams(
            dimension_semantics=("parallel",),  # batch rows shard across TCs on v7x
            **compiler_kwargs,
        ),
    )(x, *params)


# ----------------------------- parameter setup --------------------------------


def init_linear(key, in_dim, out_dim):
    """PyTorch-style uniform(-1/sqrt(fan_in), 1/sqrt(fan_in)); W stored (in, out)."""
    kw, kb = jax.random.split(key)
    bound = 1.0 / math.sqrt(in_dim)
    w = jax.random.uniform(kw, (in_dim, out_dim), jnp.float32, -bound, bound)
    b = jax.random.uniform(kb, (1, out_dim), jnp.float32, -bound, bound)
    return w, b


def init_encoder_subnet_params(key, input_dim, latent_dim, hidden_dim):
    keys = jax.random.split(key, 4)
    w1, b1 = init_linear(keys[0], input_dim, hidden_dim)
    w2, b2 = init_linear(keys[1], hidden_dim, hidden_dim)
    w3, b3 = init_linear(keys[2], hidden_dim, hidden_dim)
    # Final layer kept as a single (hidden, 2*latent) head; mu/logvar are split
    # inside the kernel exactly like mu_logvar[:, :latent] / [:, latent:].
    w4, b4 = init_linear(keys[3], hidden_dim, 2 * latent_dim)
    return (w1, b1, w2, b2, w3, b3, w4, b4)


# ---------------------------- pure-JAX reference -------------------------------


def encoder_subnet_reference(x, params, latent_dim):
    w1, b1, w2, b2, w3, b3, w4, b4 = params
    x = x.astype(jnp.float32)
    hp = jax.lax.Precision.HIGHEST
    h = jnp.tanh(jnp.dot(x, w1, precision=hp) + b1)
    h = jnp.tanh(jnp.dot(h, w2, precision=hp) + b2)
    h = jnp.tanh(jnp.dot(h, w3, precision=hp) + b3)
    y = jnp.dot(h, w4, precision=hp) + b4
    return y[:, :latent_dim], y[:, latent_dim:]


# ---------------------------------- main ---------------------------------------

if __name__ == "__main__":
    batch = 8
    input_dim = 16
    hidden_dim = 32
    latent_dim = 4
    # dropout rate irrelevant here: Dropout is identity in eval-mode forward.
    # TODO(synk): training-mode dropout would need pltpu.prng_seed/prng_random_bits.

    root = jax.random.PRNGKey(0)
    k_x, k_p = jax.random.split(root)

    x = jax.random.normal(k_x, (batch, input_dim), jnp.float32)
    params = init_encoder_subnet_params(k_p, input_dim, latent_dim, hidden_dim)

    mu, logvar = encoder_subnet_forward(x, params, latent_dim)
    jax.block_until_ready((mu, logvar))

    assert mu.shape == (batch, latent_dim)
    assert logvar.shape == (batch, latent_dim)

    # Cross-check against a pure-JAX reference of the same forward.
    # Note: kernel dots use default MXU precision (bf16 multi-pass for f32)
    # while the reference requests Precision.HIGHEST; at these dims the
    # discrepancy is far below the 2e-3 tolerance.
    mu_ref, logvar_ref = encoder_subnet_reference(x, params, latent_dim)
    assert jnp.allclose(mu, mu_ref, atol=2e-3, rtol=2e-3)
    assert jnp.allclose(logvar, logvar_ref, atol=2e-3, rtol=2e-3)

    print("KERNEL_OK")
</pallas_src>

<mosaic_0001>
module attributes {stable_mosaic.version = 11 : i64} {
  func.func @encoder_subnet_kernel(%arg0: i32, %arg1: memref<8x16xf32, #tpu.memory_space<vmem>>, %arg2: memref<16x32xf32, #tpu.memory_space<vmem>>, %arg3: memref<1x32xf32, #tpu.memory_space<vmem>>, %arg4: memref<32x32xf32, #tpu.memory_space<vmem>>, %arg5: memref<1x32xf32, #tpu.memory_space<vmem>>, %arg6: memref<32x32xf32, #tpu.memory_space<vmem>>, %arg7: memref<1x32xf32, #tpu.memory_space<vmem>>, %arg8: memref<32x8xf32, #tpu.memory_space<vmem>>, %arg9: memref<1x8xf32, #tpu.memory_space<vmem>>, %arg10: memref<8x4xf32, #tpu.memory_space<vmem>>, %arg11: memref<8x4xf32, #tpu.memory_space<vmem>>) attributes {dimension_semantics = [#tpu.dimension_semantics<parallel>], iteration_bounds = array<i64: 1>, scalar_prefetch = 0 : i64, scratch_operands = 0 : i64, tpu.core_type = #tpu.core_type<tc>, window_params = [{transform_indices = @transform_0, window_bounds = array<i64: 8, 16>}, {pipeline_mode = #tpu.pipeline_mode<synchronous>, transform_indices = @transform_1, window_bounds = array<i64: 16, 32>}, {pipeline_mode = #tpu.pipeline_mode<synchronous>, transform_indices = @transform_2, window_bounds = array<i64: 1, 32>}, {pipeline_mode = #tpu.pipeline_mode<synchronous>, transform_indices = @transform_3, window_bounds = array<i64: 32, 32>}, {pipeline_mode = #tpu.pipeline_mode<synchronous>, transform_indices = @transform_4, window_bounds = array<i64: 1, 32>}, {pipeline_mode = #tpu.pipeline_mode<synchronous>, transform_indices = @transform_5, window_bounds = array<i64: 32, 32>}, {pipeline_mode = #tpu.pipeline_mode<synchronous>, transform_indices = @transform_6, window_bounds = array<i64: 1, 32>}, {pipeline_mode = #tpu.pipeline_mode<synchronous>, transform_indices = @transform_7, window_bounds = array<i64: 32, 8>}, {pipeline_mode = #tpu.pipeline_mode<synchronous>, transform_indices = @transform_8, window_bounds = array<i64: 1, 8>}, {transform_indices = @transform_9, window_bounds = array<i64: 8, 4>}, {transform_indices = @transform_10, window_bounds = array<i64: 8, 4>}]} {
    %c0 = arith.constant 0 : index
    %c0_0 = arith.constant 0 : index
    %0 = vector.load %arg1[%c0, %c0_0] : memref<8x16xf32, #tpu.memory_space<vmem>>, vector<8x16xf32>
    %c0_1 = arith.constant 0 : index
    %c0_2 = arith.constant 0 : index
    %1 = vector.load %arg2[%c0_1, %c0_2] : memref<16x32xf32, #tpu.memory_space<vmem>>, vector<16x32xf32>
    %cst = arith.constant dense<0.000000e+00> : vector<8x32xf32>
    %2 = tpu.matmul %0, %1, %cst {dimension_numbers = #tpu.dot_dimension_numbers<[1], [0], [0], [1], [0, 0, 1, 1], [], []>} : vector<8x16xf32>, vector<16x32xf32>, vector<8x32xf32> -> vector<8x32xf32>
    %c0_3 = arith.constant 0 : index
    %c0_4 = arith.constant 0 : index
    %3 = vector.load %arg3[%c0_3, %c0_4] : memref<1x32xf32, #tpu.memory_space<vmem>>, vector<1x32xf32>
    %4 = vector.broadcast %3 : vector<1x32xf32> to vector<8x32xf32>
    %5 = arith.addf %2, %4 : vector<8x32xf32>
    %6 = math.tanh %5 : vector<8x32xf32>
    %c0_5 = arith.constant 0 : index
    %c0_6 = arith.constant 0 : index
    %7 = vector.load %arg4[%c0_5, %c0_6] : memref<32x32xf32, #tpu.memory_space<vmem>>, vector<32x32xf32>
    %cst_7 = arith.constant dense<0.000000e+00> : vector<8x32xf32>
    %8 = tpu.matmul %6, %7, %cst_7 {dimension_numbers = #tpu.dot_dimension_numbers<[1], [0], [0], [1], [0, 0, 1, 1], [], []>} : vector<8x32xf32>, vector<32x32xf32>, vector<8x32xf32> -> vector<8x32xf32>
    %c0_8 = arith.constant 0 : index
    %c0_9 = arith.constant 0 : index
    %9 = vector.load %arg5[%c0_8, %c0_9] : memref<1x32xf32, #tpu.memory_space<vmem>>, vector<1x32xf32>
    %10 = vector.broadcast %9 : vector<1x32xf32> to vector<8x32xf32>
    %11 = arith.addf %8, %10 : vector<8x32xf32>
    %12 = math.tanh %11 : vector<8x32xf32>
    %c0_10 = arith.constant 0 : index
    %c0_11 = arith.constant 0 : index
    %13 = vector.load %arg6[%c0_10, %c0_11] : memref<32x32xf32, #tpu.memory_space<vmem>>, vector<32x32xf32>
    %cst_12 = arith.constant dense<0.000000e+00> : vector<8x32xf32>
    %14 = tpu.matmul %12, %13, %cst_12 {dimension_numbers = #tpu.dot_dimension_numbers<[1], [0], [0], [1], [0, 0, 1, 1], [], []>} : vector<8x32xf32>, vector<32x32xf32>, vector<8x32xf32> -> vector<8x32xf32>
    %c0_13 = arith.constant 0 : index
    %c0_14 = arith.constant 0 : index
    %15 = vector.load %arg7[%c0_13, %c0_14] : memref<1x32xf32, #tpu.memory_space<vmem>>, vector<1x32xf32>
    %16 = vector.broadcast %15 : vector<1x32xf32> to vector<8x32xf32>
    %17 = arith.addf %14, %16 : vector<8x32xf32>
    %18 = math.tanh %17 : vector<8x32xf32>
    %c0_15 = arith.constant 0 : index
    %c0_16 = arith.constant 0 : index
    %19 = vector.load %arg8[%c0_15, %c0_16] : memref<32x8xf32, #tpu.memory_space<vmem>>, vector<32x8xf32>
    %cst_17 = arith.constant dense<0.000000e+00> : vector<8x8xf32>
    %20 = tpu.matmul %18, %19, %cst_17 {dimension_numbers = #tpu.dot_dimension_numbers<[1], [0], [0], [1], [0, 0, 1, 1], [], []>} : vector<8x32xf32>, vector<32x8xf32>, vector<8x8xf32> -> vector<8x8xf32>
    %c0_18 = arith.constant 0 : index
    %c0_19 = arith.constant 0 : index
    %21 = vector.load %arg9[%c0_18, %c0_19] : memref<1x8xf32, #tpu.memory_space<vmem>>, vector<1x8xf32>
    %22 = vector.broadcast %21 : vector<1x8xf32> to vector<8x8xf32>
    %23 = arith.addf %20, %22 : vector<8x8xf32>
    %24 = vector.extract_strided_slice %23 {offsets = [0, 0], sizes = [8, 4], strides = [1, 1]} : vector<8x8xf32> to vector<8x4xf32>
    %c0_20 = arith.constant 0 : index
    %c0_21 = arith.constant 0 : index
    %25 = vector.load %arg10[%c0_20, %c0_21] : memref<8x4xf32, #tpu.memory_space<vmem>>, vector<8x4xf32>
    tpu.vector_store %arg10[%c0_20, %c0_21], %24 {strides = array<i32>} : memref<8x4xf32, #tpu.memory_space<vmem>>, vector<8x4xf32>,
    %26 = vector.extract_strided_slice %23 {offsets = [0, 4], sizes = [8, 4], strides = [1, 1]} : vector<8x8xf32> to vector<8x4xf32>
    %c0_22 = arith.constant 0 : index
    %c0_23 = arith.constant 0 : index
    %27 = vector.load %arg11[%c0_22, %c0_23] : memref<8x4xf32, #tpu.memory_space<vmem>>, vector<8x4xf32>
    tpu.vector_store %arg11[%c0_22, %c0_23], %26 {strides = array<i32>} : memref<8x4xf32, #tpu.memory_space<vmem>>, vector<8x4xf32>,
    return
  }
  func.func @transform_0(%arg0: i32) -> (i32, i32) {
    %c0_i32 = arith.constant 0 : i32
    %c0_i32_0 = arith.constant 0 : i32
    return %arg0, %c0_i32 : i32, i32
  }
  func.func @transform_1(%arg0: i32) -> (i32, i32) {
    %c0_i32 = arith.constant 0 : i32
    %c0_i32_0 = arith.constant 0 : i32
    %c0_i32_1 = arith.constant 0 : i32
    return %c0_i32, %c0_i32_0 : i32, i32
  }
  func.func @transform_2(%arg0: i32) -> (i32, i32) {
    %c0_i32 = arith.constant 0 : i32
    %c0_i32_0 = arith.constant 0 : i32
    %c0_i32_1 = arith.constant 0 : i32
    return %c0_i32, %c0_i32_0 : i32, i32
  }
  func.func @transform_3(%arg0: i32) -> (i32, i32) {
    %c0_i32 = arith.constant 0 : i32
    %c0_i32_0 = arith.constant 0 : i32
    %c0_i32_1 = arith.constant 0 : i32
    return %c0_i32, %c0_i32_0 : i32, i32
  }
  func.func @transform_4(%arg0: i32) -> (i32, i32) {
    %c0_i32 = arith.constant 0 : i32
    %c0_i32_0 = arith.constant 0 : i32
    %c0_i32_1 = arith.constant 0 : i32
    return %c0_i32, %c0_i32_0 : i32, i32
  }
  func.func @transform_5(%arg0: i32) -> (i32, i32) {
    %c0_i32 = arith.constant 0 : i32
    %c0_i32_0 = arith.constant 0 : i32
    %c0_i32_1 = arith.constant 0 : i32
    return %c0_i32, %c0_i32_0 : i32, i32
  }
  func.func @transform_6(%arg0: i32) -> (i32, i32) {
    %c0_i32 = arith.constant 0 : i32
    %c0_i32_0 = arith.constant 0 : i32
    %c0_i32_1 = arith.constant 0 : i32
    return %c0_i32, %c0_i32_0 : i32, i32
  }
  func.func @transform_7(%arg0: i32) -> (i32, i32) {
    %c0_i32 = arith.constant 0 : i32
    %c0_i32_0 = arith.constant 0 : i32
    %c0_i32_1 = arith.constant 0 : i32
    return %c0_i32, %c0_i32_0 : i32, i32
  }
  func.func @transform_8(%arg0: i32) -> (i32, i32) {
    %c0_i32 = arith.constant 0 : i32
    %c0_i32_0 = arith.constant 0 : i32
    %c0_i32_1 = arith.constant 0 : i32
    return %c0_i32, %c0_i32_0 : i32, i32
  }
  func.func @transform_9(%arg0: i32) -> (i32, i32) {
    %c0_i32 = arith.constant 0 : i32
    %c0_i32_0 = arith.constant 0 : i32
    return %arg0, %c0_i32 : i32, i32
  }
  func.func @transform_10(%arg0: i32) -> (i32, i32) {
    %c0_i32 = arith.constant 0 : i32
    %c0_i32_0 = arith.constant 0 : i32
    return %arg0, %c0_i32 : i32, i32
  }
}

</mosaic_0001>

<llo_original>
// kernel: tpu_custom_call.1
$region0: #{tpu_custom_call.1}
  #allocation0 [shape = 'u32[]', space=smem, size = 0x4, offset = 0x4, fixed_abs, tag = 'smem constant byte address 0x4 - core index']
  #allocation1 [shape = 'u32[144,128]{1,0:T(1,128)}', space=vmem, size = 0x12000, scoped, tag = 'internal scratch']
  %s0 = inlined_call_operand.vmem [shape: f32[8,16], index: 0, kind: input, shape index: {}]
  %s1 = inlined_call_operand.hbm [shape: f32[16,32], index: 1, kind: input, shape index: {}]
  %s2 = inlined_call_operand.vmem [shape: f32[1,32], index: 2, kind: input, shape index: {}]
  %s3 = inlined_call_operand.vmem [shape: f32[32,32], index: 3, kind: input, shape index: {}]
  %s4 = inlined_call_operand.vmem [shape: f32[1,32], index: 4, kind: input, shape index: {}]
  %s5 = inlined_call_operand.hbm [shape: f32[32,32], index: 5, kind: input, shape index: {}]
  %s6 = inlined_call_operand.vmem [shape: f32[1,32], index: 6, kind: input, shape index: {}]
  %s7 = inlined_call_operand.vmem [shape: f32[32,8], index: 7, kind: input, shape index: {}]
  %s8 = inlined_call_operand.vmem [shape: f32[1,8], index: 8, kind: input, shape index: {}]
  %s9 = inlined_call_operand.vmem [shape: f32[8,4], index: 9, kind: output, shape index: {0}]
  %s10 = inlined_call_operand.vmem [shape: f32[8,4], index: 10, kind: output, shape index: {1}]
  %11 = xla_tuple %s9, %s10
  %s12 = sld [smem:[#allocation0]]
  $region62: #{tpu_custom_call.1} parent=0
    _
  %s14 = ssub.s32 1, %s12
  %s15 = scalar_select 0, %s14, %s12
  $region1: #{tpu_custom_call.1} parent=0
    #allocation2 [shape = 'u8[8192]{0}', space=vmem, size = 0x2000, scoped, tag = 'input window, operand 1, single buffered']
    #allocation3 [shape = 's32[1]{0}', space=sflag, size = 0x4, scoped, tag = 'scoped memory for tpu_custom_call.1']
    #allocation4 [shape = 'u8[16384]{0}', space=vmem, size = 0x4000, scoped, tag = 'input window, operand 5, single buffered']
    #allocation5 [shape = 's32[1]{0}', space=sflag, size = 0x4, scoped, tag = 'scoped memory for tpu_custom_call.1']
    %16 = vsyncpa [#allocation3], 0
    %17 = vsyncpa [#allocation5], 0
    // Predicated region
    $region2: #{tpu_custom_call.1} parent=1 // pred_check
      _
    $region3: #{tpu_custom_call.1} parent=1 // pred_check_branch
      %19 = sbr.rel (0) target = $region5
    $region4: #{tpu_custom_call.1} parent=1 // pred_region
      _
    $region5: #{tpu_custom_call.1} parent=1 // pred_fallthru
      _
    // Predicated region
    $region6: #{tpu_custom_call.1} parent=1 // pred_check
      _
    $region7: #{tpu_custom_call.1} parent=1 // pred_check_branch
      %21 = sbr.rel (0) target = $region9
    $region8: #{tpu_custom_call.1} parent=1 // pred_region
      %s23 = ssub.s32 256, 256
      %24 = vsyncadd [#allocation3], %s23
      %s25 = sshll.u32 [#allocation2], 4
      %s26 = int_to_ptr.vmem [resolvable:$true] %s25
      %31 = dma.hbm_to_vmem [thread:$0]  %s1, 256, %s26, [#allocation3], 128, 128, 8
    $region9: #{tpu_custom_call.1} parent=1 // pred_fallthru
      _
    // Predicated region
    $region10: #{tpu_custom_call.1} parent=1 // pred_check
      _
    $region11: #{tpu_custom_call.1} parent=1 // pred_check_branch
      %33 = sbr.rel (0) target = $region13
    $region12: #{tpu_custom_call.1} parent=1 // pred_region
      _
    $region13: #{tpu_custom_call.1} parent=1 // pred_fallthru
      _
    // Predicated region
    $region14: #{tpu_custom_call.1} parent=1 // pred_check
      _
    $region15: #{tpu_custom_call.1} parent=1 // pred_check_branch
      %35 = sbr.rel (0) target = $region17
    $region16: #{tpu_custom_call.1} parent=1 // pred_region
      _
    $region17: #{tpu_custom_call.1} parent=1 // pred_fallthru
      _
    // Predicated region
    $region18: #{tpu_custom_call.1} parent=1 // pred_check
      _
    $region19: #{tpu_custom_call.1} parent=1 // pred_check_branch
      %37 = sbr.rel (0) target = $region21
    $region20: #{tpu_custom_call.1} parent=1 // pred_region
      _
    $region21: #{tpu_custom_call.1} parent=1 // pred_fallthru
      _
    // Predicated region
    $region22: #{tpu_custom_call.1} parent=1 // pred_check
      _
    $region23: #{tpu_custom_call.1} parent=1 // pred_check_branch
      %39 = sbr.rel (0) target = $region25
    $region24: #{tpu_custom_call.1} parent=1 // pred_region
      %s41 = ssub.s32 512, 512
      %42 = vsyncadd [#allocation5], %s41
      %s43 = sshll.u32 [#allocation4], 4
      %s44 = int_to_ptr.vmem [resolvable:$true] %s43
      %49 = dma.hbm_to_vmem [thread:$0]  %s5, 512, %s44, [#allocation5], 128, 128, 8
    $region25: #{tpu_custom_call.1} parent=1 // pred_fallthru
      _
    // Predicated region
    $region26: #{tpu_custom_call.1} parent=1 // pred_check
      _
    $region27: #{tpu_custom_call.1} parent=1 // pred_check_branch
      %51 = sbr.rel (0) target = $region29
    $region28: #{tpu_custom_call.1} parent=1 // pred_region
      _
    $region29: #{tpu_custom_call.1} parent=1 // pred_fallthru
      _
    // Predicated region
    $region30: #{tpu_custom_call.1} parent=1 // pred_check
      _
    $region31: #{tpu_custom_call.1} parent=1 // pred_check_branch
      %53 = sbr.rel (0) target = $region33
    $region32: #{tpu_custom_call.1} parent=1 // pred_region
      _
    $region33: #{tpu_custom_call.1} parent=1 // pred_fallthru
      _
    // Predicated region
    $region34: #{tpu_custom_call.1} parent=1 // pred_check
      _
    $region35: #{tpu_custom_call.1} parent=1 // pred_check_branch
      %55 = sbr.rel (0) target = $region37
    $region36: #{tpu_custom_call.1} parent=1 // pred_region
      _
    $region37: #{tpu_custom_call.1} parent=1 // pred_fallthru
      _
    // Predicated region
    $region38: #{tpu_custom_call.1} parent=1 // pred_check
      _
    $region39: #{tpu_custom_call.1} parent=1 // pred_check_branch
      %57 = sbr.rel (0) target = $region41
    $region40: #{tpu_custom_call.1} parent=1 // pred_region
      %58 = dma.done [#allocation3], 256
    $region41: #{tpu_custom_call.1} parent=1 // pred_fallthru
      _
    // Predicated region
    $region42: #{tpu_custom_call.1} parent=1 // pred_check
      _
    $region43: #{tpu_custom_call.1} parent=1 // pred_check_branch
      %60 = sbr.rel (0) target = $region45
    $region44: #{tpu_custom_call.1} parent=1 // pred_region
      %61 = dma.done [#allocation5], 512
    $region45: #{tpu_custom_call.1} parent=1 // pred_fallthru
      _
    %v62 = vld [vmem:[%s0] sm:$0xff]
    %v63 = vld [vmem:[#allocation2] sm:$0xff]
    %v64 = vld [vmem:[#allocation2 + $0x8] sm:$0xff]
    %v65 = vld [vmem:[%s2] sm:$0x1]
    %v67 = vlaneseq
    %v68 = vshrl.u32 %v67, 7
    %v69 = vsub.s32 0, %v68
    %v70 = vrot.slane %v65, %v69
    %vm72 = vcmask 130048
    %v74 = vsel %vm72, %v62, 0
    %76 = vmatprep.subr.mxu0 0.0
    %77 = vmatpush1.msra.mxu0 0.0
    %78 = vmatprep.subr.mxu0 0.0
    %79 = vmatpush1.msra.mxu0 0.0
    %80 = vmatprep.subr.mxu0 0.0
    %81 = vmatpush1.msra.mxu0 0.0
    %82 = vmatprep.subr.mxu0 0.0
    %83 = vmatpush1.msra.mxu0 0.0
    %84 = vmatprep.subr.mxu0 0.0
    %85 = vmatpush1.msra.mxu0 0.0
    %86 = vmatprep.subr.mxu0 0.0
    %87 = vmatpush1.msra.mxu0 0.0
    %88 = vmatprep.subr.mxu0 0.0
    %89 = vmatpush1.msra.mxu0 0.0
    %90 = vmatprep.subr.mxu0 0.0
    %91 = vmatpush1.msra.mxu0 0.0
    %92 = vmatprep.subr.mxu0 0.0
    %93 = vmatpush1.msra.mxu0 0.0
    %94 = vmatprep.subr.mxu0 0.0
    %95 = vmatpush1.msra.mxu0 0.0
    %96 = vmatprep.subr.mxu0 0.0
    %97 = vmatpush1.msra.mxu0 0.0
    %98 = vmatprep.subr.mxu0 0.0
    %99 = vmatpush1.msra.mxu0 0.0
    %100 = vmatprep.subr.mxu0 0.0
    %101 = vmatpush1.msra.mxu0 0.0
    %102 = vmatprep.subr.mxu0 0.0
    %103 = vmatpush1.msra.mxu0 0.0
    %104 = vmatprep.subr.mxu0 0.0
    %105 = vmatpush1.msra.mxu0 %v64
    %106 = vmatprep.subr.mxu0 0.0
    %107 = vmatpush1.msra.mxu0 %v63
    %108 = vmatprep.subr.mxu0 0.0
    %109 = vmatpush2.msra.mxu0 0.0
    %110 = vmatprep.subr.mxu0 0.0
    %111 = vmatpush2.msra.mxu0 0.0
    %112 = vmatprep.subr.mxu0 0.0
    %113 = vmatpush2.msra.mxu0 0.0
    %114 = vmatprep.subr.mxu0 0.0
    %115 = vmatpush2.msra.mxu0 0.0
    %116 = vmatprep.subr.mxu0 0.0
    %117 = vmatpush2.msra.mxu0 0.0
    %118 = vmatprep.subr.mxu0 0.0
    %119 = vmatpush2.msra.mxu0 0.0
    %120 = vmatprep.subr.mxu0 0.0
    %121 = vmatpush2.msra.mxu0 0.0
    %122 = vmatprep.subr.mxu0 0.0
    %123 = vmatpush2.msra.mxu0 0.0
    %124 = vmatprep.subr.mxu0 0.0
    %125 = vmatpush2.msra.mxu0 0.0
    %126 = vmatprep.subr.mxu0 0.0
    %127 = vmatpush2.msra.mxu0 0.0
    %128 = vmatprep.subr.mxu0 0.0
    %129 = vmatpush2.msra.mxu0 0.0
    %130 = vmatprep.subr.mxu0 0.0
    %131 = vmatpush2.msra.mxu0 0.0
    %132 = vmatprep.subr.mxu0 0.0
    %133 = vmatpush2.msra.mxu0 0.0
    %134 = vmatprep.subr.mxu0 0.0
    %135 = vmatpush2.msra.mxu0 0.0
    %136 = vmatprep.subr.mxu0 0.0
    %137 = vmatpush2.msra.mxu0 0.0
    %138 = vmatprep.subr.mxu0 0.0
    %139 = vmatpush2.msra.mxu0 0.0
    %140 = vmatprep.mubr.f32.mxu0 0.0
    %141 = vmatmul.mubr.f32.gmra.mxu0 %v74
    %v142 = vpop.f32.mrf.mxu0
    %v143 = vadd.f32 %v70, %v142
    %v144 = vpop.f32.mrf.mxu0
    %145 = vdwg.mxu0
    %v146 = vtanh.pop %v143
    %v147 = vld [vmem:[%s3] sm:$0xff]
    %v148 = vld [vmem:[%s3 + $0x8] sm:$0xff]
    %v149 = vld [vmem:[%s3 + $0x10] sm:$0xff]
    %v150 = vld [vmem:[%s3 + $0x18] sm:$0xff]
    %v151 = vld [vmem:[%s4] sm:$0x1]
    %v153 = vlaneseq
    %v154 = vshrl.u32 %v153, 7
    %v155 = vsub.s32 0, %v154
    %v156 = vrot.slane %v151, %v155
    %vm158 = vcmask 261120
    %v160 = vsel %vm158, %v146, 0
    %162 = vmatprep.subr.mxu0 0.0
    %163 = vmatpush1.msra.mxu0 0.0
    %164 = vmatprep.subr.mxu0 0.0
    %165 = vmatpush1.msra.mxu0 0.0
    %166 = vmatprep.subr.mxu0 0.0
    %167 = vmatpush1.msra.mxu0 0.0
    %168 = vmatprep.subr.mxu0 0.0
    %169 = vmatpush1.msra.mxu0 0.0
    %170 = vmatprep.subr.mxu0 0.0
    %171 = vmatpush1.msra.mxu0 0.0
    %172 = vmatprep.subr.mxu0 0.0
    %173 = vmatpush1.msra.mxu0 0.0
    %174 = vmatprep.subr.mxu0 0.0
    %175 = vmatpush1.msra.mxu0 0.0
    %176 = vmatprep.subr.mxu0 0.0
    %177 = vmatpush1.msra.mxu0 0.0
    %178 = vmatprep.subr.mxu0 0.0
    %179 = vmatpush1.msra.mxu0 0.0
    %180 = vmatprep.subr.mxu0 0.0
    %181 = vmatpush1.msra.mxu0 0.0
    %182 = vmatprep.subr.mxu0 0.0
    %183 = vmatpush1.msra.mxu0 0.0
    %184 = vmatprep.subr.mxu0 0.0
    %185 = vmatpush1.msra.mxu0 0.0
    %186 = vmatprep.subr.mxu0 0.0
    %187 = vmatpush1.msra.mxu0 %v150
    %188 = vmatprep.subr.mxu0 0.0
    %189 = vmatpush1.msra.mxu0 %v149
    %190 = vmatprep.subr.mxu0 0.0
    %191 = vmatpush1.msra.mxu0 %v148
    %192 = vmatprep.subr.mxu0 0.0
    %193 = vmatpush1.msra.mxu0 %v147
    %194 = vmatprep.subr.mxu0 0.0
    %195 = vmatpush2.msra.mxu0 0.0
    %196 = vmatprep.subr.mxu0 0.0
    %197 = vmatpush2.msra.mxu0 0.0
    %198 = vmatprep.subr.mxu0 0.0
    %199 = vmatpush2.msra.mxu0 0.0
    %200 = vmatprep.subr.mxu0 0.0
    %201 = vmatpush2.msra.mxu0 0.0
    %202 = vmatprep.subr.mxu0 0.0
    %203 = vmatpush2.msra.mxu0 0.0
    %204 = vmatprep.subr.mxu0 0.0
    %205 = vmatpush2.msra.mxu0 0.0
    %206 = vmatprep.subr.mxu0 0.0
    %207 = vmatpush2.msra.mxu0 0.0
    %208 = vmatprep.subr.mxu0 0.0
    %209 = vmatpush2.msra.mxu0 0.0
    %210 = vmatprep.subr.mxu0 0.0
    %211 = vmatpush2.msra.mxu0 0.0
    %212 = vmatprep.subr.mxu0 0.0
    %213 = vmatpush2.msra.mxu0 0.0
    %214 = vmatprep.subr.mxu0 0.0
    %215 = vmatpush2.msra.mxu0 0.0
    %216 = vmatprep.subr.mxu0 0.0
    %217 = vmatpush2.msra.mxu0 0.0
    %218 = vmatprep.subr.mxu0 0.0
    %219 = vmatpush2.msra.mxu0 0.0
    %220 = vmatprep.subr.mxu0 0.0
    %221 = vmatpush2.msra.mxu0 0.0
    %222 = vmatprep.subr.mxu0 0.0
    %223 = vmatpush2.msra.mxu0 0.0
    %224 = vmatprep.subr.mxu0 0.0
    %225 = vmatpush2.msra.mxu0 0.0
    %226 = vmatprep.mubr.f32.mxu0 0.0
    %227 = vmatmul.mubr.f32.gmra.mxu0 %v160
    %v228 = vpop.f32.mrf.mxu0
    %v229 = vadd.f32 %v156, %v228
    %v230 = vpop.f32.mrf.mxu0
    %231 = vdwg.mxu0
    %v232 = vtanh.pop %v229
    %v233 = vld [vmem:[#allocation4] sm:$0xff]
    %v234 = vld [vmem:[#allocation4 + $0x8] sm:$0xff]
    %v235 = vld [vmem:[#allocation4 + $0x10] sm:$0xff]
    %v236 = vld [vmem:[#allocation4 + $0x18] sm:$0xff]
    %v237 = vld [vmem:[%s6] sm:$0x1]
    %v239 = vlaneseq
    %v240 = vshrl.u32 %v239, 7
    %v241 = vsub.s32 0, %v240
    %v242 = vrot.slane %v237, %v241
    %v245 = vsel %vm158, %v232, 0
    %247 = vmatprep.subr.mxu0 0.0
    %248 = vmatpush1.msra.mxu0 0.0
    %249 = vmatprep.subr.mxu0 0.0
    %250 = vmatpush1.msra.mxu0 0.0
    %251 = vmatprep.subr.mxu0 0.0
    %252 = vmatpush1.msra.mxu0 0.0
    %253 = vmatprep.subr.mxu0 0.0
    %254 = vmatpush1.msra.mxu0 0.0
    %255 = vmatprep.subr.mxu0 0.0
    %256 = vmatpush1.msra.mxu0 0.0
    %257 = vmatprep.subr.mxu0 0.0
    %258 = vmatpush1.msra.mxu0 0.0
    %259 = vmatprep.subr.mxu0 0.0
    %260 = vmatpush1.msra.mxu0 0.0
    %261 = vmatprep.subr.mxu0 0.0
    %262 = vmatpush1.msra.mxu0 0.0
    %263 = vmatprep.subr.mxu0 0.0
    %264 = vmatpush1.msra.mxu0 0.0
    %265 = vmatprep.subr.mxu0 0.0
    %266 = vmatpush1.msra.mxu0 0.0
    %267 = vmatprep.subr.mxu0 0.0
    %268 = vmatpush1.msra.mxu0 0.0
    %269 = vmatprep.subr.mxu0 0.0
    %270 = vmatpush1.msra.mxu0 0.0
    %271 = vmatprep.subr.mxu0 0.0
    %272 = vmatpush1.msra.mxu0 %v236
    %273 = vmatprep.subr.mxu0 0.0
    %274 = vmatpush1.msra.mxu0 %v235
    %275 = vmatprep.subr.mxu0 0.0
    %276 = vmatpush1.msra.mxu0 %v234
    %277 = vmatprep.subr.mxu0 0.0
    %278 = vmatpush1.msra.mxu0 %v233
    %279 = vmatprep.subr.mxu0 0.0
    %280 = vmatpush2.msra.mxu0 0.0
    %281 = vmatprep.subr.mxu0 0.0
    %282 = vmatpush2.msra.mxu0 0.0
    %283 = vmatprep.subr.mxu0 0.0
    %284 = vmatpush2.msra.mxu0 0.0
    %285 = vmatprep.subr.mxu0 0.0
    %286 = vmatpush2.msra.mxu0 0.0
    %287 = vmatprep.subr.mxu0 0.0
    %288 = vmatpush2.msra.mxu0 0.0
    %289 = vmatprep.subr.mxu0 0.0
    %290 = vmatpush2.msra.mxu0 0.0
    %291 = vmatprep.subr.mxu0 0.0
    %292 = vmatpush2.msra.mxu0 0.0
    %293 = vmatprep.subr.mxu0 0.0
    %294 = vmatpush2.msra.mxu0 0.0
    %295 = vmatprep.subr.mxu0 0.0
    %296 = vmatpush2.msra.mxu0 0.0
    %297 = vmatprep.subr.mxu0 0.0
    %298 = vmatpush2.msra.mxu0 0.0
    %299 = vmatprep.subr.mxu0 0.0
    %300 = vmatpush2.msra.mxu0 0.0
    %301 = vmatprep.subr.mxu0 0.0
    %302 = vmatpush2.msra.mxu0 0.0
    %303 = vmatprep.subr.mxu0 0.0
    %304 = vmatpush2.msra.mxu0 0.0
    %305 = vmatprep.subr.mxu0 0.0
    %306 = vmatpush2.msra.mxu0 0.0
    %307 = vmatprep.subr.mxu0 0.0
    %308 = vmatpush2.msra.mxu0 0.0
    %309 = vmatprep.subr.mxu0 0.0
    %310 = vmatpush2.msra.mxu0 0.0
    %311 = vmatprep.mubr.f32.mxu0 0.0
    %312 = vmatmul.mubr.f32.gmra.mxu0 %v245
    %v313 = vpop.f32.mrf.mxu0
    %v314 = vadd.f32 %v242, %v313
    %v315 = vpop.f32.mrf.mxu0
    %316 = vdwg.mxu0
    %v317 = vtanh.pop %v314
    %v318 = vld [vmem:[%s7] sm:$0xff]
    %v319 = vld [vmem:[%s7 + $0x8] sm:$0xff]
    %v320 = vld [vmem:[%s7 + $0x10] sm:$0xff]
    %v321 = vld [vmem:[%s7 + $0x18] sm:$0xff]
    %v322 = vld [vmem:[%s8] sm:$0x1]
    %v324 = vlaneseq
    %v325 = vshrl.u32 %v324, 7
    %v326 = vsub.s32 0, %v325
    %v327 = vrot.slane %v322, %v326
    %v330 = vsel %vm158, %v317, 0
    %332 = vmatprep.subr.mxu0 0.0
    %333 = vmatpush1.msra.mxu0 0.0
    %334 = vmatprep.subr.mxu0 0.0
    %335 = vmatpush1.msra.mxu0 0.0
    %336 = vmatprep.subr.mxu0 0.0
    %337 = vmatpush1.msra.mxu0 0.0
    %338 = vmatprep.subr.mxu0 0.0
    %339 = vmatpush1.msra.mxu0 0.0
    %340 = vmatprep.subr.mxu0 0.0
    %341 = vmatpush1.msra.mxu0 0.0
    %342 = vmatprep.subr.mxu0 0.0
    %343 = vmatpush1.msra.mxu0 0.0
    %344 = vmatprep.subr.mxu0 0.0
    %345 = vmatpush1.msra.mxu0 0.0
    %346 = vmatprep.subr.mxu0 0.0
    %347 = vmatpush1.msra.mxu0 0.0
    %348 = vmatprep.subr.mxu0 0.0
    %349 = vmatpush1.msra.mxu0 0.0
    %350 = vmatprep.subr.mxu0 0.0
    %351 = vmatpush1.msra.mxu0 0.0
    %352 = vmatprep.subr.mxu0 0.0
    %353 = vmatpush1.msra.mxu0 0.0
    %354 = vmatprep.subr.mxu0 0.0
    %355 = vmatpush1.msra.mxu0 0.0
    %356 = vmatprep.subr.mxu0 0.0
    %357 = vmatpush1.msra.mxu0 %v321
    %358 = vmatprep.subr.mxu0 0.0
    %359 = vmatpush1.msra.mxu0 %v320
    %360 = vmatprep.subr.mxu0 0.0
    %361 = vmatpush1.msra.mxu0 %v319
    %362 = vmatprep.subr.mxu0 0.0
    %363 = vmatpush1.msra.mxu0 %v318
    %364 = vmatprep.subr.mxu0 0.0
    %365 = vmatpush2.msra.mxu0 0.0
    %366 = vmatprep.subr.mxu0 0.0
    %367 = vmatpush2.msra.mxu0 0.0
    %368 = vmatprep.subr.mxu0 0.0
    %369 = vmatpush2.msra.mxu0 0.0
    %370 = vmatprep.subr.mxu0 0.0
    %371 = vmatpush2.msra.mxu0 0.0
    %372 = vmatprep.subr.mxu0 0.0
    %373 = vmatpush2.msra.mxu0 0.0
    %374 = vmatprep.subr.mxu0 0.0
    %375 = vmatpush2.msra.mxu0 0.0
    %376 = vmatprep.subr.mxu0 0.0
    %377 = vmatpush2.msra.mxu0 0.0
    %378 = vmatprep.subr.mxu0 0.0
    %379 = vmatpush2.msra.mxu0 0.0
    %380 = vmatprep.subr.mxu0 0.0
    %381 = vmatpush2.msra.mxu0 0.0
    %382 = vmatprep.subr.mxu0 0.0
    %383 = vmatpush2.msra.mxu0 0.0
    %384 = vmatprep.subr.mxu0 0.0
    %385 = vmatpush2.msra.mxu0 0.0
    %386 = vmatprep.subr.mxu0 0.0
    %387 = vmatpush2.msra.mxu0 0.0
    %388 = vmatprep.subr.mxu0 0.0
    %389 = vmatpush2.msra.mxu0 0.0
    %390 = vmatprep.subr.mxu0 0.0
    %391 = vmatpush2.msra.mxu0 0.0
    %392 = vmatprep.subr.mxu0 0.0
    %393 = vmatpush2.msra.mxu0 0.0
    %394 = vmatprep.subr.mxu0 0.0
    %395 = vmatpush2.msra.mxu0 0.0
    %396 = vmatprep.mubr.f32.mxu0 0.0
    %397 = vmatmul.mubr.f32.gmra.mxu0 %v330
    %v398 = vpop.f32.mrf.mxu0
    %v399 = vadd.f32 %v327, %v398
    %v400 = vpop.f32.mrf.mxu0
    %401 = vdwg.mxu0
    %vm402 = vcmask 31744
    %403 = vst.msk [vmem:[%s9] sm:$0xff] %vm402, %v399
    %405 = vrot.lane.b32.xlu0 %v399, 124
    %v406 = vpop.permute.xlu0 %405
    %408 = vst.msk [vmem:[%s10] sm:$0xff] %vm402, %v406
    // Predicated region
    $region46: #{tpu_custom_call.1} parent=1 // pred_check
      _
    $region47: #{tpu_custom_call.1} parent=1 // pred_check_branch
      %410 = sbr.rel (0) target = $region49
    $region48: #{tpu_custom_call.1} parent=1 // pred_region
      _
    $region49: #{tpu_custom_call.1} parent=1 // pred_fallthru
      _
    // Predicated region
    $region50: #{tpu_custom_call.1} parent=1 // pred_check
      _
    $region51: #{tpu_custom_call.1} parent=1 // pred_check_branch
      %412 = sbr.rel (0) target = $region53
    $region52: #{tpu_custom_call.1} parent=1 // pred_region
      _
    $region53: #{tpu_custom_call.1} parent=1 // pred_fallthru
      _
    // Predicated region
    $region54: #{tpu_custom_call.1} parent=1 // pred_check
      _
    $region55: #{tpu_custom_call.1} parent=1 // pred_check_branch
      %414 = sbr.rel (0) target = $region57
    $region56: #{tpu_custom_call.1} parent=1 // pred_region
      _
    $region57: #{tpu_custom_call.1} parent=1 // pred_fallthru
      _
    // Predicated region
    $region58: #{tpu_custom_call.1} parent=1 // pred_check
      _
    $region59: #{tpu_custom_call.1} parent=1 // pred_check_branch
      %416 = sbr.rel (0) target = $region61
    $region60: #{tpu_custom_call.1} parent=1 // pred_region
      _
    $region61: #{tpu_custom_call.1} parent=1 // pred_fallthru
      _
    %417 = vsyncpa [#allocation3], 1
    %418 = vsyncpa [#allocation5], 1

</llo_original>
